<compile_context>
chip_gen: v5e
topology: v5e:2x2
jax: 0.10.0
libtpu: 0.0.40
codegen_flags: <defaults>
</compile_context>

<pallas_src>
import jax
import jax.numpy as jnp
from jax.experimental import pallas as pl
from jax.experimental.pallas import tpu as pltpu


_SMALL_CHANNEL_LIMIT = 8  # O, C both <= this -> VPU FMA path instead of MXU


def _rotation_kernel_mxu(r_ref, badd_ref, x_ref, o_ref):
    # r_ref:    (O, C)  rotation matrix (tiny, resident in VMEM every step)
    # badd_ref: (O, 1)  per-output-channel bias contribution (R[:, -1] * bias)
    # x_ref:    (C, T)  one lane-dense spatial tile of one batch element
    # o_ref:    (O, T)
    acc = jnp.dot(r_ref[...], x_ref[...], preferred_element_type=jnp.float32)
    acc = acc + badd_ref[...]                      # (O, 1) broadcast over lanes
    o_ref[...] = acc.astype(o_ref.dtype)


def _rotation_kernel_vpu(r_ref, badd_ref, x_ref, o_ref):
    # Same contract as the MXU kernel.  For tiny O/C the MXU operands would be
    # padded to a nearly-empty tile; a short unrolled VPU multiply-accumulate
    # (sublane-broadcast x-row times lane-broadcast r-column) avoids that.
    x = x_ref[...].astype(jnp.float32)             # (C, T)
    r = r_ref[...].astype(jnp.float32)             # (O, C)
    o_chan, c_chan = r.shape
    t = x.shape[1]
    acc = jnp.broadcast_to(badd_ref[...], (o_chan, t))
    for c in range(c_chan):                        # static unroll, C is tiny
        acc = acc + r[:, c:c + 1] * x[c:c + 1, :]
    o_ref[...] = acc.astype(o_ref.dtype)


def _choose_hw_tile(c, o, hw):
    """Largest lane-dense (multiple of 128) spatial tile whose double-buffered
    input + output footprint stays comfortably inside the scoped VMEM limit on
    every TPU generation."""
    budget_bytes = 8 * 1024 * 1024                 # pipelined-tile budget
    per_lane_bytes = 2 * 4 * (c + o)               # 2 buffers * 4B * (in + out rows)
    t = budget_bytes // per_lane_bytes
    t = max(128, (t // 128) * 128)
    t = min(t, 16384)
    # If the whole spatial extent fits in one tile, use it directly (a block
    # equal to the full array dim is always legal, even if not %128).
    return hw if hw <= t else t


def conv_layer_rotation(x, rotation_matrix, bias=0.0):
    """Equivalent of ConvLayerRotation.forward.

    x:               (N, C, H, W) NCHW, PyTorch convention
    rotation_matrix: (O, C) when bias == 0, else (O, C + 1)
    bias:            python scalar; the torch module appends a constant
                     channel -- here it is folded into an in-kernel add
                     instead of materializing a concatenated copy of x in HBM.
    """
    N, C, H, W = x.shape
    O, C_in = rotation_matrix.shape

    if bias != 0:
        assert C_in == C + 1, (
            f"rotation matrix expects {C_in} channels, got {C} + bias channel")
        r_main = rotation_matrix[:, :C]
        bias_add = (rotation_matrix[:, C:]
                    * jnp.asarray(bias, rotation_matrix.dtype)).astype(jnp.float32)
    else:
        assert C_in == C, f"rotation matrix expects {C_in} channels, got {C}"
        r_main = rotation_matrix
        bias_add = jnp.zeros((O, 1), dtype=jnp.float32)

    HW = H * W
    x_flat = x.reshape(N, C, HW)

    T = _choose_hw_tile(C, O, HW)
    n_hw_tiles = pl.cdiv(HW, T)

    kernel = (_rotation_kernel_vpu
              if (O <= _SMALL_CHANNEL_LIMIT and C <= _SMALL_CHANNEL_LIMIT)
              else _rotation_kernel_mxu)

    cost = pl.CostEstimate(
        flops=2 * N * O * C * HW + N * O * HW,
        transcendentals=0,
        bytes_accessed=4 * (N * C * HW + N * O * HW + O * C_in + O),
    )

    out_flat = pl.pallas_call(
        kernel,
        out_shape=jax.ShapeDtypeStruct((N, O, HW), x.dtype),
        grid_spec=pltpu.PrefetchScalarGridSpec(
            num_scalar_prefetch=0,
            grid=(N, n_hw_tiles),
            in_specs=[
                # tiny rotation matrix + bias column: resident every step
                pl.BlockSpec((O, C), lambda n, t: (0, 0)),
                pl.BlockSpec((O, 1), lambda n, t: (0, 0)),
                # one lane-dense spatial tile of one batch element per step
                pl.BlockSpec((pl.Squeezed(), C, T), lambda n, t: (n, 0, t)),
            ],
            out_specs=pl.BlockSpec((pl.Squeezed(), O, T), lambda n, t: (n, 0, t)),
        ),
        compiler_params=pltpu.CompilerParams(
            dimension_semantics=("parallel", "parallel"),
            vmem_limit_bytes=32 * 1024 * 1024,
        ),
        cost_estimate=cost,
    )(r_main, bias_add, x_flat)

    return out_flat.reshape(N, O, H, W)


if __name__ == "__main__":
    key = jax.random.PRNGKey(0)
    kx, kr, krb, kx2 = jax.random.split(key, 4)

    # --- small-channel (VPU FMA) path, bias == 0 -----------------------------
    N, C, H, W = 2, 4, 16, 16
    O = 4  # out_channels == in_channels for a rotation
    x = jax.random.normal(kx, (N, C, H, W), dtype=jnp.float32)
    rot = jax.random.normal(kr, (O, C), dtype=jnp.float32)

    y = jax.block_until_ready(conv_layer_rotation(x, rot, bias=0))
    y_ref = jnp.einsum("oc,nchw->nohw", rot, x)
    assert y.shape == (N, O, H, W)
    assert jnp.allclose(y, y_ref, atol=1e-4, rtol=1e-4)

    # --- bias != 0 path: extra R column folded into an in-kernel add ---------
    rot_b = jax.random.normal(krb, (O, C + 1), dtype=jnp.float32)
    yb = jax.block_until_ready(conv_layer_rotation(x, rot_b, bias=0.5))
    xb = jnp.concatenate([x, jnp.full((N, 1, H, W), 0.5, dtype=x.dtype)], axis=1)
    yb_ref = jnp.einsum("oc,nchw->nohw", rot_b, xb)
    assert jnp.allclose(yb, yb_ref, atol=1e-4, rtol=1e-4)

    # --- larger-channel (MXU) path --------------------------------------------
    C2 = O2 = 32
    x2 = jax.random.normal(kx2, (N, C2, H, W), dtype=jnp.float32)
    rot2 = jax.random.normal(jax.random.PRNGKey(1), (O2, C2), dtype=jnp.float32)
    y2 = jax.block_until_ready(conv_layer_rotation(x2, rot2, bias=0))
    y2_ref = jnp.einsum("oc,nchw->nohw", rot2, x2)
    assert jnp.allclose(y2, y2_ref, atol=1e-4, rtol=1e-4)

    print("KERNEL_OK")
</pallas_src>

<mosaic_0001>
module attributes {stable_mosaic.version = 11 : i64} {
  func.func @_rotation_kernel_vpu(%arg0: i32, %arg1: i32, %arg2: memref<4x4xf32, #tpu.memory_space<vmem>>, %arg3: memref<4x1xf32, #tpu.memory_space<vmem>>, %arg4: memref<1x4x256xf32, #tpu.memory_space<vmem>>, %arg5: memref<1x4x256xf32, #tpu.memory_space<vmem>>) attributes {dimension_semantics = [#tpu.dimension_semantics<parallel>, #tpu.dimension_semantics<parallel>], iteration_bounds = array<i64: 2, 1>, scalar_prefetch = 0 : i64, scratch_operands = 0 : i64, tpu.core_type = #tpu.core_type<tc>, window_params = [{pipeline_mode = #tpu.pipeline_mode<synchronous>, transform_indices = @transform_0, window_bounds = array<i64: 4, 4>}, {pipeline_mode = #tpu.pipeline_mode<synchronous>, transform_indices = @transform_1, window_bounds = array<i64: 4, 1>}, {transform_indices = @transform_2, window_bounds = array<i64: 1, 4, 256>}, {transform_indices = @transform_3, window_bounds = array<i64: 1, 4, 256>}]} {
    %c0 = arith.constant 0 : index
    %c0_0 = arith.constant 0 : index
    %c0_1 = arith.constant 0 : index
    %0 = vector.load %arg4[%c0, %c0_0, %c0_1] : memref<1x4x256xf32, #tpu.memory_space<vmem>>, vector<1x4x256xf32>
    %1 = vector.shape_cast %0 : vector<1x4x256xf32> to vector<4x256xf32>
    %c0_2 = arith.constant 0 : index
    %c0_3 = arith.constant 0 : index
    %2 = vector.load %arg2[%c0_2, %c0_3] : memref<4x4xf32, #tpu.memory_space<vmem>>, vector<4x4xf32>
    %c0_4 = arith.constant 0 : index
    %c0_5 = arith.constant 0 : index
    %3 = vector.load %arg3[%c0_4, %c0_5] : memref<4x1xf32, #tpu.memory_space<vmem>>, vector<4x1xf32>
    %4 = vector.shape_cast %3 : vector<4x1xf32> to vector<4x1xf32>
    %5 = vector.broadcast %4 : vector<4x1xf32> to vector<4x256xf32>
    %6 = vector.extract_strided_slice %2 {offsets = [0, 0], sizes = [4, 1], strides = [1, 1]} : vector<4x4xf32> to vector<4x1xf32>
    %7 = vector.extract_strided_slice %1 {offsets = [0, 0], sizes = [1, 256], strides = [1, 1]} : vector<4x256xf32> to vector<1x256xf32>
    %8 = vector.broadcast %6 : vector<4x1xf32> to vector<4x256xf32>
    %9 = vector.broadcast %7 : vector<1x256xf32> to vector<4x256xf32>
    %10 = arith.mulf %8, %9 : vector<4x256xf32>
    %11 = arith.addf %5, %10 : vector<4x256xf32>
    %12 = vector.extract_strided_slice %2 {offsets = [0, 1], sizes = [4, 1], strides = [1, 1]} : vector<4x4xf32> to vector<4x1xf32>
    %13 = vector.extract_strided_slice %1 {offsets = [1, 0], sizes = [1, 256], strides = [1, 1]} : vector<4x256xf32> to vector<1x256xf32>
    %14 = vector.broadcast %12 : vector<4x1xf32> to vector<4x256xf32>
    %15 = vector.broadcast %13 : vector<1x256xf32> to vector<4x256xf32>
    %16 = arith.mulf %14, %15 : vector<4x256xf32>
    %17 = arith.addf %11, %16 : vector<4x256xf32>
    %18 = vector.extract_strided_slice %2 {offsets = [0, 2], sizes = [4, 1], strides = [1, 1]} : vector<4x4xf32> to vector<4x1xf32>
    %19 = vector.extract_strided_slice %1 {offsets = [2, 0], sizes = [1, 256], strides = [1, 1]} : vector<4x256xf32> to vector<1x256xf32>
    %20 = vector.broadcast %18 : vector<4x1xf32> to vector<4x256xf32>
    %21 = vector.broadcast %19 : vector<1x256xf32> to vector<4x256xf32>
    %22 = arith.mulf %20, %21 : vector<4x256xf32>
    %23 = arith.addf %17, %22 : vector<4x256xf32>
    %24 = vector.extract_strided_slice %2 {offsets = [0, 3], sizes = [4, 1], strides = [1, 1]} : vector<4x4xf32> to vector<4x1xf32>
    %25 = vector.extract_strided_slice %1 {offsets = [3, 0], sizes = [1, 256], strides = [1, 1]} : vector<4x256xf32> to vector<1x256xf32>
    %26 = vector.broadcast %24 : vector<4x1xf32> to vector<4x256xf32>
    %27 = vector.broadcast %25 : vector<1x256xf32> to vector<4x256xf32>
    %28 = arith.mulf %26, %27 : vector<4x256xf32>
    %29 = arith.addf %23, %28 : vector<4x256xf32>
    %c0_6 = arith.constant 0 : index
    %c0_7 = arith.constant 0 : index
    %c0_8 = arith.constant 0 : index
    %30 = vector.load %arg5[%c0_6, %c0_7, %c0_8] : memref<1x4x256xf32, #tpu.memory_space<vmem>>, vector<1x4x256xf32>
    %31 = vector.shape_cast %30 : vector<1x4x256xf32> to vector<4x256xf32>
    %32 = vector.shape_cast %29 : vector<4x256xf32> to vector<1x4x256xf32>
    tpu.vector_store %arg5[%c0_6, %c0_7, %c0_8], %32 {strides = array<i32>} : memref<1x4x256xf32, #tpu.memory_space<vmem>>, vector<1x4x256xf32>,
    return
  }
  func.func @transform_0(%arg0: i32, %arg1: i32) -> (i32, i32) {
    %c0_i32 = arith.constant 0 : i32
    %c0_i32_0 = arith.constant 0 : i32
    %c0_i32_1 = arith.constant 0 : i32
    return %c0_i32, %c0_i32_0 : i32, i32
  }
  func.func @transform_1(%arg0: i32, %arg1: i32) -> (i32, i32) {
    %c0_i32 = arith.constant 0 : i32
    %c0_i32_0 = arith.constant 0 : i32
    %c0_i32_1 = arith.constant 0 : i32
    return %c0_i32, %c0_i32_0 : i32, i32
  }
  func.func @transform_2(%arg0: i32, %arg1: i32) -> (i32, i32, i32) {
    %c0_i32 = arith.constant 0 : i32
    %c0_i32_0 = arith.constant 0 : i32
    return %arg0, %c0_i32, %arg1 : i32, i32, i32
  }
  func.func @transform_3(%arg0: i32, %arg1: i32) -> (i32, i32, i32) {
    %c0_i32 = arith.constant 0 : i32
    %c0_i32_0 = arith.constant 0 : i32
    return %arg0, %c0_i32, %arg1 : i32, i32, i32
  }
}

</mosaic_0001>

<llo_original>
// kernel: tpu_custom_call.1
$region0: #{tpu_custom_call.1}
  #allocation0 [shape = 'u32[]', space=smem, size = 0x4, offset = 0x4, fixed_abs, tag = 'smem constant byte address 0x4 - core index']
  #allocation1 [shape = 'u32[72,128]{1,0:T(1,128)}', space=vmem, size = 0x9000, scoped, tag = 'internal scratch']
  %s0 = inlined_call_operand.vmem [shape: f32[4,4], index: 0, kind: input, shape index: {}]
  %s1 = inlined_call_operand.vmem [shape: f32[4,1], index: 1, kind: input, shape index: {}]
  %s2 = inlined_call_operand.hbm [shape: f32[2,4,256], index: 2, kind: input, shape index: {}]
  %s3 = inlined_call_operand.hbm [shape: f32[2,4,256], index: 3, kind: output, shape index: {}]
  %s4 = sld [smem:[#allocation0]]
  $region49: #{tpu_custom_call.1} parent=0
    _
  %s6 = ssub.s32 1, %s4
  %s7 = scalar_select 0, %s6, %s4
  $region1: #{tpu_custom_call.1} parent=0
    #allocation2 [shape = 'u8[8192]{0}', space=vmem, size = 0x2000, scoped, tag = 'input window, operand 2']
    #allocation3 [shape = 's32[2]{0}', space=sflag, size = 0x8, scoped, tag = 'scoped memory for tpu_custom_call.1']
    #allocation4 [shape = 's32[2]{0}', space=sflag, size = 0x8, scoped, tag = 'scoped memory for tpu_custom_call.1']
    #allocation5 [shape = 'u8[8192]{0}', space=vmem, size = 0x2000, scoped, tag = 'output window, operand 0']
    %8 = vsyncpa [#allocation3], 0
    %s9 = scalar_lea.sflag [#allocation3], 1
    %10 = vsyncpa %s9, 0
    %11 = vsyncpa [#allocation4], 0
    %s12 = scalar_lea.sflag [#allocation4], 1
    %13 = vsyncpa %s12, 0
    loop: start=0, step=1, limit=4
    $region2: #{tpu_custom_call.1} parent=1 // loop_pre_header
      _
    $region3: #{tpu_custom_call.1} parent=1 // loop_header
      %s15 = sphi 0, %s19
      %p16 = scmp.ge.s32.totalorder %s15, 4
      %s22 = sphi 0, %s34
      %s23 = sphi 0, %s30
      %s24 = sphi 0, %s22
      %s25 = sphi 0, %s23
      %s26 = sphi 0, %s24
      %s27 = sphi 0, %s25
      %s35 = sphi 0, %s35
      %s37 = sphi 0, %s35
      %s38 = sphi 0, %s37
      %s52 = sphi 0, %s38
      %s56 = sphi 0, %s56
      %s58 = sphi 0, %s56
      %s59 = sphi 0, %s58
      %s73 = sphi 0, %s59
      %s81 = sphi 0, %s83
      %s84 = sphi 0, %s81
      %s85 = sphi 0, %s84
      %s101 = sphi 0, %s85
      %s109 = sphi 0, %s111
      %s112 = sphi 0, %s109
      %s113 = sphi 0, %s112
      %s129 = sphi 0, %s113
    $region4: #{tpu_custom_call.1} parent=1 // loop_header_branch
      %18 = sbr.rel (%p16) target = $region8
    $region5: #{tpu_custom_call.1} parent=1 // loop_body
      %s20 = ssub.s32 %s15, 1
      %s21 = ssub.s32 %s15, 2
      %s28 = sadd.s32 1, %s23
      %p29 = scmp.ge.s32.totalorder %s28, 1
      %s30 = scalar_select %p29, 0, %s28
      %s31 = sadd.s32 1, %s22
      %s32 = scalar_select %p29, %s31, %s22
      %p33 = scmp.ge.s32.totalorder %s32, 2
      %s34 = scalar_select %p33, 0, %s32
      %s36 = sadd.s32 %s35, 1
      %p39 = scmp.eq.s32.totalorder %s15, 1
      %p40 = scmp.ne.s32.totalorder %s35, %s37
      %p41 = scmp.eq.s32.totalorder %s15, 0
      %p42 = por %p40, %p41
      %p43 = scmp.ne.s32.totalorder %s35, %s37
      %p44 = scmp.eq.s32.totalorder %s20, 1
      %p45 = por %p43, %p44
      %p46 = scmp.ne.s32.totalorder %s37, %s38
      %p47 = scmp.eq.s32.totalorder %s20, 0
      %p48 = por %p46, %p47
      %p49 = scmp.ne.s32.totalorder %s37, %s38
      %p50 = scmp.eq.s32.totalorder %s21, 1
      %p51 = por %p49, %p50
      %p53 = scmp.ne.s32.totalorder %s38, %s52
      %p54 = scmp.eq.s32.totalorder %s21, 0
      %p55 = por %p53, %p54
      %s57 = sadd.s32 %s56, 1
      %p60 = scmp.eq.s32.totalorder %s15, 1
      %p61 = scmp.ne.s32.totalorder %s56, %s58
      %p62 = scmp.eq.s32.totalorder %s15, 0
      %p63 = por %p61, %p62
      %p64 = scmp.ne.s32.totalorder %s56, %s58
      %p65 = scmp.eq.s32.totalorder %s20, 1
      %p66 = por %p64, %p65
      %p67 = scmp.ne.s32.totalorder %s58, %s59
      %p68 = scmp.eq.s32.totalorder %s20, 0
      %p69 = por %p67, %p68
      %p70 = scmp.ne.s32.totalorder %s58, %s59
      %p71 = scmp.eq.s32.totalorder %s21, 1
      %p72 = por %p70, %p71
      %p74 = scmp.ne.s32.totalorder %s59, %s73
      %p75 = scmp.eq.s32.totalorder %s21, 0
      %p76 = por %p74, %p75
      %s77 = ssub.s32 %s22, %s34
      %s78 = ssub.s32 %s23, %s30
      %s79 = sor.u32 %s77, %s78
      %p80 = scmp.eq.s32.totalorder %s79, 0
      %s82 = sadd.s32 %s81, 1
      %s83 = scalar_select %p80, %s81, %s82
      %p86 = pneg %p80
      %p87 = scmp.eq.s32.totalorder %s15, 1
      %p88 = por %p86, %p87
      %p89 = scmp.ne.s32.totalorder %s81, %s84
      %p90 = scmp.eq.s32.totalorder %s15, 0
      %p91 = por %p89, %p90
      %p92 = scmp.ne.s32.totalorder %s81, %s84
      %p93 = scmp.eq.s32.totalorder %s20, 1
      %p94 = por %p92, %p93
      %p95 = scmp.ne.s32.totalorder %s84, %s85
      %p96 = scmp.eq.s32.totalorder %s20, 0
      %p97 = por %p95, %p96
      %p98 = scmp.ne.s32.totalorder %s84, %s85
      %p99 = scmp.eq.s32.totalorder %s21, 1
      %p100 = por %p98, %p99
      %p102 = scmp.ne.s32.totalorder %s85, %s101
      %p103 = scmp.eq.s32.totalorder %s21, 0
      %p104 = por %p102, %p103
      %s105 = ssub.s32 %s22, %s34
      %s106 = ssub.s32 %s23, %s30
      %s107 = sor.u32 %s105, %s106
      %p108 = scmp.eq.s32.totalorder %s107, 0
      %s110 = sadd.s32 %s109, 1
      %s111 = scalar_select %p108, %s109, %s110
      %p114 = pneg %p108
      %p115 = scmp.eq.s32.totalorder %s15, 1
      %p116 = por %p114, %p115
      %p117 = scmp.ne.s32.totalorder %s109, %s112
      %p118 = scmp.eq.s32.totalorder %s15, 0
      %p119 = por %p117, %p118
      %p120 = scmp.ne.s32.totalorder %s109, %s112
      %p121 = scmp.eq.s32.totalorder %s20, 1
      %p122 = por %p120, %p121
      %p123 = scmp.ne.s32.totalorder %s112, %s113
      %p124 = scmp.eq.s32.totalorder %s20, 0
      %p125 = por %p123, %p124
      %p126 = scmp.ne.s32.totalorder %s112, %s113
      %p127 = scmp.eq.s32.totalorder %s21, 1
      %p128 = por %p126, %p127
      %p130 = scmp.ne.s32.totalorder %s113, %s129
      %p131 = scmp.eq.s32.totalorder %s21, 0
      %p132 = por %p130, %p131
      %p133 = scmp.le.s32.totalorder 1, %s15
      %p134 = scmp.lt.s32.totalorder %s15, 3
      %p135 = pnand %p133, %p134
      %p136 = pneg %p135
      // Predicated region
      $region9: #{tpu_custom_call.1} parent=5 // pred_check
        _
      $region10: #{tpu_custom_call.1} parent=5 // pred_check_branch
        %138 = sbr.rel (%p135) target = $region12
      $region11: #{tpu_custom_call.1} parent=5 // pred_region
        %s139 = ssub.s32 %s15, 1
        // Predicated region
        $region13: #{tpu_custom_call.1} parent=11 // pred_check
          %p140 = pneg %p48
        $region14: #{tpu_custom_call.1} parent=11 // pred_check_branch
          %142 = sbr.rel (%p140) target = $region16
        $region15: #{tpu_custom_call.1} parent=11 // pred_region
          _
        $region16: #{tpu_custom_call.1} parent=11 // pred_fallthru
          _
        // Predicated region
        $region17: #{tpu_custom_call.1} parent=11 // pred_check
          %p143 = pneg %p69
        $region18: #{tpu_custom_call.1} parent=11 // pred_check_branch
          %145 = sbr.rel (%p143) target = $region20
        $region19: #{tpu_custom_call.1} parent=11 // pred_region
          _
        $region20: #{tpu_custom_call.1} parent=11 // pred_fallthru
          _
      $region12: #{tpu_custom_call.1} parent=5 // pred_fallthru
        _
      %p146 = scmp.lt.s32.totalorder %s15, 2
      // Predicated region
      $region21: #{tpu_custom_call.1} parent=5 // pred_check
        %p147 = pneg %p146
      $region22: #{tpu_custom_call.1} parent=5 // pred_check_branch
        %149 = sbr.rel (%p147) target = $region24
      $region23: #{tpu_custom_call.1} parent=5 // pred_region
        // Predicated region
        $region25: #{tpu_custom_call.1} parent=23 // pred_check
          %p150 = pneg %p91
        $region26: #{tpu_custom_call.1} parent=23 // pred_check_branch
          %152 = sbr.rel (%p150) target = $region28
        $region27: #{tpu_custom_call.1} parent=23 // pred_region
          %s153 = sand.u32 %s81, 1
          %s154 = scalar_lea.sflag [#allocation3], %s153
          %s155 = sand.u32 %s81, 1
          %s156 = smul.addr %s155, 8
          %s157 = scalar_lea.vmem [#allocation2], %s156
          %s158 = smul.u32 2, %s23
          %160 = vsyncadd %s154, 0
          %s161 = smul.addr %s22, 2
          %s162 = sadd.s32 %s158, %s161
          %s163 = smul.addr %s162, 4
          %s164 = scalar_lea.hbm %s2, %s163
          %s166 = sshll.u32 %s164, 4
          %s167 = int_to_ptr.hbm [resolvable:$true] %s166
          %s168 = sshll.u32 %s157, 4
          %s169 = int_to_ptr.vmem [resolvable:$true] %s168
          %171 = dma.hbm_to_vmem [thread:$0]  %s167, 128, %s169, %s154
        $region28: #{tpu_custom_call.1} parent=23 // pred_fallthru
          _
      $region24: #{tpu_custom_call.1} parent=5 // pred_fallthru
        _
      %p172 = scmp.le.s32.totalorder 1, %s15
      %p173 = scmp.lt.s32.totalorder %s15, 3
      %p174 = pnand %p172, %p173
      %p175 = pneg %p174
      // Predicated region
      $region29: #{tpu_custom_call.1} parent=5 // pred_check
        _
      $region30: #{tpu_custom_call.1} parent=5 // pred_check_branch
        %177 = sbr.rel (%p174) target = $region32
      $region31: #{tpu_custom_call.1} parent=5 // pred_region
        %s178 = ssub.s32 %s15, 1
        %s179 = sand.u32 %s84, 1
        %s180 = scalar_lea.sflag [#allocation3], %s179
        %s181 = sand.u32 %s84, 1
        %s182 = smul.addr %s181, 8
        %s183 = scalar_lea.vmem [#allocation2], %s182
        // Predicated region
        $region33: #{tpu_custom_call.1} parent=31 // pred_check
          %p184 = pneg %p97
        $region34: #{tpu_custom_call.1} parent=31 // pred_check_branch
          %186 = sbr.rel (%p184) target = $region36
        $region35: #{tpu_custom_call.1} parent=31 // pred_region
          %188 = dma.done %s180, 128
        $region36: #{tpu_custom_call.1} parent=31 // pred_fallthru
          _
        %p189 = pneg %p48
        %p190 = pneg %p45
        %p191 = pneg %p69
        %p192 = pneg %p66
        %s193 = sand.u32 %s84, 1
        %s194 = scalar_lea.sflag [#allocation3], %s193
        %s195 = sand.u32 %s84, 1
        %s196 = smul.addr %s195, 8
        %s197 = scalar_lea.vmem [#allocation2], %s196
        %p198 = pneg %p97
        %p199 = pneg %p94
        %p200 = pneg %p125
        %p201 = pneg %p122
        %s202 = sand.u32 %s112, 1
        %s203 = scalar_lea.sflag [#allocation4], %s202
        %s204 = sand.u32 %s112, 1
        %s205 = smul.addr %s204, 8
        %s206 = scalar_lea.vmem [#allocation5], %s205
        %s207 = smul.u32 2, %s25
        %s208 = smul.u32 2, %s25
        %v209 = vld [vmem:[%s183] sm:$0xff]
        %v210 = vld [vmem:[%s0] sm:$0xf]
        %v211 = vld [vmem:[%s1] sm:$0xf]
        %213 = vset.pattern.permute.xlu0 0
        %214 = vperm.xlu0 %213, %v211
        %v215 = vpop.permute.xlu0 %214
        %218 = vset.pattern.permute.xlu0 0
        %219 = vperm.xlu0 %218, %v210
        %v220 = vpop.permute.xlu0 %219
        %v223 = vperm.slane %v209, 0
        %v224 = vperm.slane %v209, 4
        %v227 = vperm.slane %v223, 0
        %v228 = vperm.slane %v224, 0
        %v229 = vmul.f32 %v220, %v227
        %v230 = vmul.f32 %v220, %v228
        %v231 = vadd.f32 %v215, %v229
        %v232 = vadd.f32 %v215, %v230
        %233 = vset.pattern.permute.xlu0 1
        %234 = vperm.xlu0 %233, %v210
        %v235 = vpop.permute.xlu0 %234
        %v237 = vperm.slane %v209, 1
        %v238 = vperm.slane %v209, 5
        %v241 = vperm.slane %v237, 1
        %v242 = vperm.slane %v238, 1
        %v243 = vmul.f32 %v235, %v241
        %v244 = vmul.f32 %v235, %v242
        %v245 = vadd.f32 %v231, %v243
        %v246 = vadd.f32 %v232, %v244
        %247 = vset.pattern.permute.xlu0 2
        %248 = vperm.xlu0 %247, %v210
        %v249 = vpop.permute.xlu0 %248
        %v251 = vperm.slane %v209, 2
        %v252 = vperm.slane %v209, 6
        %v255 = vperm.slane %v251, 2
        %v256 = vperm.slane %v252, 2
        %v257 = vmul.f32 %v249, %v255
        %v258 = vmul.f32 %v249, %v256
        %v259 = vadd.f32 %v245, %v257
        %v260 = vadd.f32 %v246, %v258
        %261 = vset.pattern.permute.xlu0 3
        %262 = vperm.xlu0 %261, %v210
        %v263 = vpop.permute.xlu0 %262
        %v265 = vperm.slane %v209, 3
        %v266 = vperm.slane %v209, 7
        %v269 = vperm.slane %v265, 3
        %v270 = vperm.slane %v266, 3
        %v271 = vmul.f32 %v263, %v269
        %v272 = vmul.f32 %v263, %v270
        %v273 = vadd.f32 %v259, %v271
        %v274 = vadd.f32 %v260, %v272
        %v277 = vrot.slane %v274, 4
        %vm278 = vcmask 1043456
        %v279 = vsel %vm278, %v273, %v277
        %281 = vst [vmem:[%s206] sm:$0xff] %v279
        %s282 = sand.u32 %s112, 1
        %s283 = scalar_lea.sflag [#allocation4], %s282
        %s284 = sand.u32 %s112, 1
        %s285 = smul.addr %s284, 8
        %s286 = scalar_lea.vmem [#allocation5], %s285
        // Predicated region
        $region37: #{tpu_custom_call.1} parent=31 // pred_check
          %p287 = pneg %p122
        $region38: #{tpu_custom_call.1} parent=31 // pred_check_branch
          %289 = sbr.rel (%p287) target = $region40
        $region39: #{tpu_custom_call.1} parent=31 // pred_region
          %s290 = smul.u32 2, %s25
          %292 = vsyncadd %s283, 0
          %s293 = smul.addr %s24, 2
          %s294 = sadd.s32 %s290, %s293
          %s295 = smul.addr %s294, 4
          %s296 = scalar_lea.hbm %s3, %s295
          %s298 = sshll.u32 %s286, 4
          %s299 = int_to_ptr.vmem [resolvable:$true] %s298
          %s300 = sshll.u32 %s296, 4
          %s301 = int_to_ptr.hbm [resolvable:$true] %s300
          %303 = dma.vmem_to_hbm [thread:$0]  %s299, 128, %s301, %s283
        $region40: #{tpu_custom_call.1} parent=31 // pred_fallthru
          _
      $region32: #{tpu_custom_call.1} parent=5 // pred_fallthru
        _
      %p304 = scmp.le.s32.totalorder 2, %s15
      // Predicated region
      $region41: #{tpu_custom_call.1} parent=5 // pred_check
        %p305 = pneg %p304
      $region42: #{tpu_custom_call.1} parent=5 // pred_check_branch
        %307 = sbr.rel (%p305) target = $region44
      $region43: #{tpu_custom_call.1} parent=5 // pred_region
        %s308 = ssub.s32 %s15, 2
        // Predicated region
        $region45: #{tpu_custom_call.1} parent=43 // pred_check
          %p309 = pneg %p128
        $region46: #{tpu_custom_call.1} parent=43 // pred_check_branch
          %311 = sbr.rel (%p309) target = $region48
        $region47: #{tpu_custom_call.1} parent=43 // pred_region
          %s312 = sand.u32 %s113, 1
          %s313 = scalar_lea.sflag [#allocation4], %s312
          %s314 = sand.u32 %s113, 1
          %s315 = smul.addr %s314, 8
          %s316 = scalar_lea.vmem [#allocation5], %s315
          %318 = dma.done %s313, 128
        $region48: #{tpu_custom_call.1} parent=43 // pred_fallthru
          _
      $region44: #{tpu_custom_call.1} parent=5 // pred_fallthru
        _
    $region6: #{tpu_custom_call.1} parent=1 // loop_footer
      %s19 = sadd.s32 1, %s15
    $region7: #{tpu_custom_call.1} parent=1 // loop_footer_branch
      %14 = sbr.rel target = $region3
    $region8: #{tpu_custom_call.1} parent=1 // loop_exit
      _
    %319 = vsyncpa [#allocation3], 1
    %s320 = scalar_lea.sflag [#allocation3], 1
    %321 = vsyncpa %s320, 1
    %322 = vsyncpa [#allocation4], 1
    %s323 = scalar_lea.sflag [#allocation4], 1
    %324 = vsyncpa %s323, 1

</llo_original>
